<compile_context>
chip_gen: v5e
topology: v5e:2x2
jax: 0.10.0
libtpu: 0.0.40
codegen_flags: <defaults>
</compile_context>

<pallas_src>
import functools

import jax
import jax.numpy as jnp
from jax.experimental import pallas as pl
from jax.experimental.pallas import tpu as pltpu


def _critic_kernel(xt_ref, w1_ref, b1_ref, w2_ref, b2_ref, w3_ref, b3_ref,
                   o_ref, *, act_dtype):
    # x tile arrives already batch-on-lanes: [D, TB], lane-dense.  No in-kernel
    # transpose; all elementwise work and the store run on [*, TB] tiles.
    xt = xt_ref[...]                                                 # [D, TB]

    # Layer 1: [H, D] @ [D, TB] -> [H, TB], f32 MXU accumulation.
    z = jnp.dot(w1_ref[...], xt, preferred_element_type=jnp.float32)
    h = jnp.tanh((z + b1_ref[...]).astype(act_dtype))               # EUP tanh

    # Layer 2: [H, H] @ [H, TB] -> [H, TB].  The w2 cast is one [32,32] vreg op
    # (a no-op when act_dtype == float32); accumulation stays f32.
    z = jnp.dot(w2_ref[...].astype(h.dtype), h,
                preferred_element_type=jnp.float32)
    h = jnp.tanh((z + b2_ref[...]).astype(act_dtype))

    # Output head (H -> 1): broadcast-multiply + sublane reduction instead of a
    # 1-column MXU matmul; result is a lane-dense [1, TB] row.
    v = jnp.sum(h.astype(jnp.float32) * w3_ref[...], axis=0, keepdims=True)
    o_ref[...] = (v + b3_ref[...]).astype(o_ref.dtype)


def _round_up(x, m):
    return int(pl.cdiv(int(x), m) * m)


def ppo_critic_forward(x, params, *, block_batch=4096,
                       act_dtype=jnp.float32):
    """x: [B, input_dim] float32 -> value estimates [B, 1] float32.

    act_dtype=jnp.bfloat16 runs the tanh activations in bf16 (recommended on
    v6e/v7x where the EUP is bf16-capable); keep the f32 default on v5e.
    """
    B, D = x.shape
    w1, b1 = params["w1"], params["b1"]        # [H, D], [H, 1]
    w2, b2 = params["w2"], params["b2"]        # [H, H], [H, 1]
    w3, b3 = params["w3"], params["b3"]        # [H, 1], [1, 1]
    H = w1.shape[0]

    # Batch tile: always a multiple of 128 (lane axis); cap at ceil(B/2) so a
    # single call produces >= 2 "parallel" grid tiles for v7x's two TCs.
    block_batch = max(128, _round_up(block_batch, 128))
    if B > 128:
        tb = min(block_batch, _round_up(pl.cdiv(B, 2), 128))
    else:
        tb = 128
    num_tiles = int(pl.cdiv(B, tb))
    b_pad = num_tiles * tb

    # Pre-transpose x to [D, B]: x tiles become lane-dense [D, tb] in VMEM and
    # the HBM->VMEM DMA is row-contiguous (no 17->128 lane padding).
    xt = x.T
    if b_pad != B:
        xt = jnp.pad(xt, ((0, 0), (0, b_pad - B)))

    kernel = functools.partial(_critic_kernel, act_dtype=act_dtype)

    flops = 2 * b_pad * (D * H + H * H + H)
    bytes_accessed = 4 * (b_pad * D + b_pad
                          + int(w1.size + b1.size + w2.size + b2.size
                                + w3.size + b3.size))
    cost = pl.CostEstimate(flops=flops, transcendentals=2 * b_pad * H,
                           bytes_accessed=bytes_accessed)

    # Weights/biases: full-array blocks, constant index_map -> VMEM resident.
    resident = lambda a: pl.BlockSpec(a.shape, lambda i: (0,) * a.ndim)

    out = pl.pallas_call(
        kernel,
        out_shape=jax.ShapeDtypeStruct((1, b_pad), jnp.float32),
        grid=(num_tiles,),
        in_specs=[
            pl.BlockSpec((D, tb), lambda i: (0, i)),     # x^T: streamed tiles
            resident(w1), resident(b1),
            resident(w2), resident(b2),
            resident(w3), resident(b3),
        ],
        out_specs=pl.BlockSpec((1, tb), lambda i: (0, i)),   # lane-dense slab
        compiler_params=pltpu.CompilerParams(
            dimension_semantics=("parallel",),               # both TCs on v7x
            vmem_limit_bytes=32 * 1024 * 1024,
        ),
        cost_estimate=cost,
    )(xt, w1, b1, w2, b2, w3, b3)

    return out[0, :B].reshape(B, 1)


def init_params(key, input_dim, hidden_size):
    """PyTorch-style nn.Linear init. Weights kept in nn.Linear's [out, in]
    layout (W3 stored transposed as [H, 1]) to match the batch-on-lanes kernel."""
    ks = jax.random.split(key, 6)

    def uniform(k, shape, fan_in):
        bound = 1.0 / jnp.sqrt(jnp.float32(fan_in))
        return jax.random.uniform(k, shape, jnp.float32, -bound, bound)

    H, D = hidden_size, input_dim
    return {
        "w1": uniform(ks[0], (H, D), D),
        "b1": uniform(ks[1], (H, 1), D),
        "w2": uniform(ks[2], (H, H), H),
        "b2": uniform(ks[3], (H, 1), H),
        "w3": uniform(ks[4], (H, 1), H),   # == PyTorch W3 [1, H] transposed
        "b3": uniform(ks[5], (1, 1), H),
    }


def reference_forward(x, p):
    h = jnp.tanh(x @ p["w1"].T + p["b1"][:, 0])
    h = jnp.tanh(h @ p["w2"].T + p["b2"][:, 0])
    return h @ p["w3"] + p["b3"][0]


if __name__ == "__main__":
    input_dim, hidden_size = 17, 32   # Walker2d observation dim; small hidden.

    key = jax.random.PRNGKey(0)
    k_x, k_x2, k_p = jax.random.split(key, 3)
    params = init_params(k_p, input_dim, hidden_size)

    # Small single-tile case (B=8; padded to one 128-column batch tile).
    x_small = jax.random.normal(k_x, (8, input_dim), dtype=jnp.float32)
    v_small = jax.block_until_ready(ppo_critic_forward(x_small, params))
    v_small_ref = reference_forward(x_small, params)
    assert v_small.shape == (8, 1)
    assert jnp.allclose(v_small, v_small_ref, atol=1e-5, rtol=1e-5)

    # Multi-tile case: 3 pipelined batch tiles, ragged batch (272), tb=128.
    x_multi = jax.random.normal(k_x2, (272, input_dim), dtype=jnp.float32)
    v_multi = jax.block_until_ready(
        ppo_critic_forward(x_multi, params, block_batch=128))
    v_multi_ref = reference_forward(x_multi, params)
    assert v_multi.shape == (272, 1)
    assert jnp.allclose(v_multi, v_multi_ref, atol=1e-5, rtol=1e-5)

    # Default large-tile path: B=272 splits into 2 "parallel" tiles of 256.
    v_def = jax.block_until_ready(ppo_critic_forward(x_multi, params))
    assert jnp.allclose(v_def, v_multi_ref, atol=1e-5, rtol=1e-5)

    # Optional bf16-activation fast path (targets bf16 EUP on v6e/v7x);
    # matmul accumulation and the head reduction stay f32.
    v_bf16 = jax.block_until_ready(
        ppo_critic_forward(x_multi, params, block_batch=128,
                           act_dtype=jnp.bfloat16))
    assert jnp.allclose(v_bf16, v_multi_ref, atol=1e-1, rtol=1e-1)

    print("KERNEL_OK")
</pallas_src>

<mosaic_0001>
module attributes {stable_mosaic.version = 11 : i64} {
  func.func @_critic_kernel(%arg0: i32, %arg1: memref<17x128xf32, #tpu.memory_space<vmem>>, %arg2: memref<32x17xf32, #tpu.memory_space<vmem>>, %arg3: memref<32x1xf32, #tpu.memory_space<vmem>>, %arg4: memref<32x32xf32, #tpu.memory_space<vmem>>, %arg5: memref<32x1xf32, #tpu.memory_space<vmem>>, %arg6: memref<32x1xf32, #tpu.memory_space<vmem>>, %arg7: memref<1x1xf32, #tpu.memory_space<vmem>>, %arg8: memref<1x128xf32, #tpu.memory_space<vmem>>) attributes {dimension_semantics = [#tpu.dimension_semantics<parallel>], iteration_bounds = array<i64: 1>, scalar_prefetch = 0 : i64, scratch_operands = 0 : i64, tpu.core_type = #tpu.core_type<tc>, window_params = [{transform_indices = @transform_0, window_bounds = array<i64: 17, 128>}, {pipeline_mode = #tpu.pipeline_mode<synchronous>, transform_indices = @transform_1, window_bounds = array<i64: 32, 17>}, {pipeline_mode = #tpu.pipeline_mode<synchronous>, transform_indices = @transform_2, window_bounds = array<i64: 32, 1>}, {pipeline_mode = #tpu.pipeline_mode<synchronous>, transform_indices = @transform_3, window_bounds = array<i64: 32, 32>}, {pipeline_mode = #tpu.pipeline_mode<synchronous>, transform_indices = @transform_4, window_bounds = array<i64: 32, 1>}, {pipeline_mode = #tpu.pipeline_mode<synchronous>, transform_indices = @transform_5, window_bounds = array<i64: 32, 1>}, {pipeline_mode = #tpu.pipeline_mode<synchronous>, transform_indices = @transform_6, window_bounds = array<i64: 1, 1>}, {transform_indices = @transform_7, window_bounds = array<i64: 1, 128>}]} {
    %c0 = arith.constant 0 : index
    %c0_0 = arith.constant 0 : index
    %0 = vector.load %arg1[%c0, %c0_0] : memref<17x128xf32, #tpu.memory_space<vmem>>, vector<17x128xf32>
    %c0_1 = arith.constant 0 : index
    %c0_2 = arith.constant 0 : index
    %1 = vector.load %arg2[%c0_1, %c0_2] : memref<32x17xf32, #tpu.memory_space<vmem>>, vector<32x17xf32>
    %cst = arith.constant dense<0.000000e+00> : vector<32x128xf32>
    %2 = tpu.matmul %1, %0, %cst {dimension_numbers = #tpu.dot_dimension_numbers<[1], [0], [0], [1], [0, 0, 1, 1], [], []>} : vector<32x17xf32>, vector<17x128xf32>, vector<32x128xf32> -> vector<32x128xf32>
    %c0_3 = arith.constant 0 : index
    %c0_4 = arith.constant 0 : index
    %3 = vector.load %arg3[%c0_3, %c0_4] : memref<32x1xf32, #tpu.memory_space<vmem>>, vector<32x1xf32>
    %4 = vector.broadcast %3 : vector<32x1xf32> to vector<32x128xf32>
    %5 = arith.addf %2, %4 : vector<32x128xf32>
    %6 = math.tanh %5 : vector<32x128xf32>
    %c0_5 = arith.constant 0 : index
    %c0_6 = arith.constant 0 : index
    %7 = vector.load %arg4[%c0_5, %c0_6] : memref<32x32xf32, #tpu.memory_space<vmem>>, vector<32x32xf32>
    %cst_7 = arith.constant dense<0.000000e+00> : vector<32x128xf32>
    %8 = tpu.matmul %7, %6, %cst_7 {dimension_numbers = #tpu.dot_dimension_numbers<[1], [0], [0], [1], [0, 0, 1, 1], [], []>} : vector<32x32xf32>, vector<32x128xf32>, vector<32x128xf32> -> vector<32x128xf32>
    %c0_8 = arith.constant 0 : index
    %c0_9 = arith.constant 0 : index
    %9 = vector.load %arg5[%c0_8, %c0_9] : memref<32x1xf32, #tpu.memory_space<vmem>>, vector<32x1xf32>
    %10 = vector.broadcast %9 : vector<32x1xf32> to vector<32x128xf32>
    %11 = arith.addf %8, %10 : vector<32x128xf32>
    %12 = math.tanh %11 : vector<32x128xf32>
    %c0_10 = arith.constant 0 : index
    %c0_11 = arith.constant 0 : index
    %13 = vector.load %arg6[%c0_10, %c0_11] : memref<32x1xf32, #tpu.memory_space<vmem>>, vector<32x1xf32>
    %14 = vector.broadcast %13 : vector<32x1xf32> to vector<32x128xf32>
    %15 = arith.mulf %12, %14 : vector<32x128xf32>
    %cst_12 = arith.constant dense<0.000000e+00> : vector<128xf32>
    %16 = vector.multi_reduction <add>, %15, %cst_12 [0] : vector<32x128xf32> to vector<128xf32>
    %17 = vector.shape_cast %16 : vector<128xf32> to vector<1x128xf32>
    %c0_13 = arith.constant 0 : index
    %c0_14 = arith.constant 0 : index
    %18 = vector.load %arg7[%c0_13, %c0_14] : memref<1x1xf32, #tpu.memory_space<vmem>>, vector<1x1xf32>
    %19 = vector.broadcast %18 : vector<1x1xf32> to vector<1x128xf32>
    %20 = arith.addf %17, %19 : vector<1x128xf32>
    %c0_15 = arith.constant 0 : index
    %c0_16 = arith.constant 0 : index
    %21 = vector.load %arg8[%c0_15, %c0_16] : memref<1x128xf32, #tpu.memory_space<vmem>>, vector<1x128xf32>
    tpu.vector_store %arg8[%c0_15, %c0_16], %20 {strides = array<i32>} : memref<1x128xf32, #tpu.memory_space<vmem>>, vector<1x128xf32>,
    return
  }
  func.func @transform_0(%arg0: i32) -> (i32, i32) {
    %c0_i32 = arith.constant 0 : i32
    %c0_i32_0 = arith.constant 0 : i32
    return %c0_i32, %arg0 : i32, i32
  }
  func.func @transform_1(%arg0: i32) -> (i32, i32) {
    %c0_i32 = arith.constant 0 : i32
    %c0_i32_0 = arith.constant 0 : i32
    %c0_i32_1 = arith.constant 0 : i32
    return %c0_i32, %c0_i32_0 : i32, i32
  }
  func.func @transform_2(%arg0: i32) -> (i32, i32) {
    %c0_i32 = arith.constant 0 : i32
    %c0_i32_0 = arith.constant 0 : i32
    %c0_i32_1 = arith.constant 0 : i32
    return %c0_i32, %c0_i32_0 : i32, i32
  }
  func.func @transform_3(%arg0: i32) -> (i32, i32) {
    %c0_i32 = arith.constant 0 : i32
    %c0_i32_0 = arith.constant 0 : i32
    %c0_i32_1 = arith.constant 0 : i32
    return %c0_i32, %c0_i32_0 : i32, i32
  }
  func.func @transform_4(%arg0: i32) -> (i32, i32) {
    %c0_i32 = arith.constant 0 : i32
    %c0_i32_0 = arith.constant 0 : i32
    %c0_i32_1 = arith.constant 0 : i32
    return %c0_i32, %c0_i32_0 : i32, i32
  }
  func.func @transform_5(%arg0: i32) -> (i32, i32) {
    %c0_i32 = arith.constant 0 : i32
    %c0_i32_0 = arith.constant 0 : i32
    %c0_i32_1 = arith.constant 0 : i32
    return %c0_i32, %c0_i32_0 : i32, i32
  }
  func.func @transform_6(%arg0: i32) -> (i32, i32) {
    %c0_i32 = arith.constant 0 : i32
    %c0_i32_0 = arith.constant 0 : i32
    %c0_i32_1 = arith.constant 0 : i32
    return %c0_i32, %c0_i32_0 : i32, i32
  }
  func.func @transform_7(%arg0: i32) -> (i32, i32) {
    %c0_i32 = arith.constant 0 : i32
    %c0_i32_0 = arith.constant 0 : i32
    return %c0_i32, %arg0 : i32, i32
  }
}

</mosaic_0001>

<llo_original>
// kernel: tpu_custom_call.1
$region0: #{tpu_custom_call.1}
  #allocation0 [shape = 'u32[]', space=smem, size = 0x4, offset = 0x4, fixed_abs, tag = 'smem constant byte address 0x4 - core index']
  #allocation1 [shape = 'u32[72,128]{1,0:T(1,128)}', space=vmem, size = 0x9000, scoped, tag = 'internal scratch']
  #allocation2 [shape = 'f32[1,1]{1,0:T(1,128)S(1)}', space=vmem, size = 0x200, scoped, tag = 'scoped memory for tpu_custom_call.1']
  %s0 = inlined_call_operand.vmem [shape: f32[17,128], index: 0, kind: input, shape index: {}]
  %s1 = inlined_call_operand.vmem [shape: f32[32,17], index: 1, kind: input, shape index: {}]
  %s2 = inlined_call_operand.vmem [shape: f32[32,1], index: 2, kind: input, shape index: {}]
  %s3 = inlined_call_operand.vmem [shape: f32[32,32], index: 3, kind: input, shape index: {}]
  %s4 = inlined_call_operand.vmem [shape: f32[32,1], index: 4, kind: input, shape index: {}]
  %s5 = inlined_call_operand.vmem [shape: f32[32,1], index: 5, kind: input, shape index: {}]
  %s6 = inlined_call_operand.<no memory space> [shape: f32[1,1], index: 6, kind: input, shape index: {}]
  %s7 = inlined_call_operand.hbm [shape: f32[1,128], index: 7, kind: output, shape index: {}]
  %s8 = sld [smem:[#allocation0]]
  $region38: #{tpu_custom_call.1} parent=0
    _
  %s10 = ssub.s32 1, %s8
  %s11 = scalar_select 0, %s10, %s8
  %v12 = vstv %s6
  %13 = vst [vmem:[#allocation2] sm:$0x1] %v12
  $region1: #{tpu_custom_call.1} parent=0
    #allocation3 [shape = 'u8[512]{0}', space=vmem, size = 0x400, scoped, tag = 'output window, operand 0, single buffered']
    #allocation4 [shape = 's32[1]{0}', space=sflag, size = 0x4, scoped, tag = 'scoped memory for tpu_custom_call.1']
    %14 = vsyncpa [#allocation4], 0
    // Predicated region
    $region2: #{tpu_custom_call.1} parent=1 // pred_check
      _
    $region3: #{tpu_custom_call.1} parent=1 // pred_check_branch
      %16 = sbr.rel (0) target = $region5
    $region4: #{tpu_custom_call.1} parent=1 // pred_region
      _
    $region5: #{tpu_custom_call.1} parent=1 // pred_fallthru
      _
    // Predicated region
    $region6: #{tpu_custom_call.1} parent=1 // pred_check
      _
    $region7: #{tpu_custom_call.1} parent=1 // pred_check_branch
      %18 = sbr.rel (0) target = $region9
    $region8: #{tpu_custom_call.1} parent=1 // pred_region
      _
    $region9: #{tpu_custom_call.1} parent=1 // pred_fallthru
      _
    // Predicated region
    $region10: #{tpu_custom_call.1} parent=1 // pred_check
      _
    $region11: #{tpu_custom_call.1} parent=1 // pred_check_branch
      %20 = sbr.rel (0) target = $region13
    $region12: #{tpu_custom_call.1} parent=1 // pred_region
      _
    $region13: #{tpu_custom_call.1} parent=1 // pred_fallthru
      _
    // Predicated region
    $region14: #{tpu_custom_call.1} parent=1 // pred_check
      _
    $region15: #{tpu_custom_call.1} parent=1 // pred_check_branch
      %22 = sbr.rel (0) target = $region17
    $region16: #{tpu_custom_call.1} parent=1 // pred_region
      _
    $region17: #{tpu_custom_call.1} parent=1 // pred_fallthru
      _
    // Predicated region
    $region18: #{tpu_custom_call.1} parent=1 // pred_check
      _
    $region19: #{tpu_custom_call.1} parent=1 // pred_check_branch
      %24 = sbr.rel (0) target = $region21
    $region20: #{tpu_custom_call.1} parent=1 // pred_region
      _
    $region21: #{tpu_custom_call.1} parent=1 // pred_fallthru
      _
    // Predicated region
    $region22: #{tpu_custom_call.1} parent=1 // pred_check
      _
    $region23: #{tpu_custom_call.1} parent=1 // pred_check_branch
      %26 = sbr.rel (0) target = $region25
    $region24: #{tpu_custom_call.1} parent=1 // pred_region
      _
    $region25: #{tpu_custom_call.1} parent=1 // pred_fallthru
      _
    // Predicated region
    $region26: #{tpu_custom_call.1} parent=1 // pred_check
      _
    $region27: #{tpu_custom_call.1} parent=1 // pred_check_branch
      %28 = sbr.rel (0) target = $region29
    $region28: #{tpu_custom_call.1} parent=1 // pred_region
      _
    $region29: #{tpu_custom_call.1} parent=1 // pred_fallthru
      _
    %v29 = vld [vmem:[%s0] sm:$0xff]
    %v30 = vld [vmem:[%s0 + $0x8] sm:$0xff]
    %v31 = vld [vmem:[%s0 + $0x10] sm:$0x1]
    %v32 = vld [vmem:[%s1] sm:$0xff]
    %v33 = vld [vmem:[%s1 + $0x8] sm:$0xff]
    %v34 = vld [vmem:[%s1 + $0x10] sm:$0xff]
    %v35 = vld [vmem:[%s1 + $0x18] sm:$0xff]
    %v36 = vld [vmem:[%s2] sm:$0xff]
    %v37 = vld [vmem:[%s2 + $0x8] sm:$0xff]
    %v38 = vld [vmem:[%s2 + $0x10] sm:$0xff]
    %v39 = vld [vmem:[%s2 + $0x18] sm:$0xff]
    %41 = vset.pattern.permute.xlu0 0
    %42 = vperm.xlu0 %41, %v36
    %v43 = vpop.permute.xlu0 %42
    %46 = vset.pattern.permute.xlu0 0
    %47 = vperm.xlu0 %46, %v37
    %v48 = vpop.permute.xlu0 %47
    %51 = vset.pattern.permute.xlu0 0
    %52 = vperm.xlu0 %51, %v38
    %v53 = vpop.permute.xlu0 %52
    %56 = vset.pattern.permute.xlu0 0
    %57 = vperm.xlu0 %56, %v39
    %v58 = vpop.permute.xlu0 %57
    %vm60 = vcmask 138240
    %v62 = vsel %vm60, %v32, 0
    %v65 = vsel %vm60, %v33, 0
    %v68 = vsel %vm60, %v34, 0
    %v71 = vsel %vm60, %v35, 0
    %vm73 = vcmask 1040384
    %v75 = vsel %vm73, %v31, 0
    %77 = vmatpush.msra.mxu0 0.0
    %78 = vmatpush.msra.mxu0 0.0
    %79 = vmatpush.msra.mxu0 0.0
    %80 = vmatpush.msra.mxu0 0.0
    %81 = vmatpush.msra.mxu0 0.0
    %82 = vmatpush.msra.mxu0 0.0
    %83 = vmatpush.msra.mxu0 0.0
    %84 = vmatpush.msra.mxu0 0.0
    %85 = vmatpush.msra.mxu0 0.0
    %86 = vmatpush.msra.mxu0 0.0
    %87 = vmatpush.msra.mxu0 0.0
    %88 = vmatpush.msra.mxu0 0.0
    %89 = vmatpush.msra.mxu0 0.0
    %90 = vmatpush.msra.mxu0 %v75
    %91 = vmatpush.msra.mxu0 %v30
    %92 = vmatpush.msra.mxu0 %v29
    %93 = vmatmul.f32.gmra.mxu0 %v62
    %v94 = vpop.f32.mrf.mxu0
    %v95 = vadd.f32 %v43, %v94
    %96 = vmatmul.f32.gmra.mxu0 %v65
    %v97 = vpop.f32.mrf.mxu0
    %v98 = vadd.f32 %v48, %v97
    %99 = vmatmul.f32.gmra.mxu0 %v68
    %v100 = vpop.f32.mrf.mxu0
    %v101 = vadd.f32 %v53, %v100
    %102 = vmatmul.f32.gmra.mxu0 %v71
    %v103 = vpop.f32.mrf.mxu0
    %v104 = vadd.f32 %v58, %v103
    %105 = vdwg.mxu0
    %v106 = vtanh.pop %v95
    %v107 = vtanh.pop %v98
    %v108 = vtanh.pop %v101
    %v109 = vtanh.pop %v104
    %v110 = vld [vmem:[%s3] sm:$0xff]
    %v111 = vld [vmem:[%s3 + $0x8] sm:$0xff]
    %v112 = vld [vmem:[%s3 + $0x10] sm:$0xff]
    %v113 = vld [vmem:[%s3 + $0x18] sm:$0xff]
    %v114 = vld [vmem:[%s4] sm:$0xff]
    %v115 = vld [vmem:[%s4 + $0x8] sm:$0xff]
    %v116 = vld [vmem:[%s4 + $0x10] sm:$0xff]
    %v117 = vld [vmem:[%s4 + $0x18] sm:$0xff]
    %119 = vset.pattern.permute.xlu0 0
    %120 = vperm.xlu0 %119, %v114
    %v121 = vpop.permute.xlu0 %120
    %124 = vset.pattern.permute.xlu0 0
    %125 = vperm.xlu0 %124, %v115
    %v126 = vpop.permute.xlu0 %125
    %129 = vset.pattern.permute.xlu0 0
    %130 = vperm.xlu0 %129, %v116
    %v131 = vpop.permute.xlu0 %130
    %134 = vset.pattern.permute.xlu0 0
    %135 = vperm.xlu0 %134, %v117
    %v136 = vpop.permute.xlu0 %135
    %vm138 = vcmask 261120
    %v140 = vsel %vm138, %v110, 0
    %v143 = vsel %vm138, %v111, 0
    %v146 = vsel %vm138, %v112, 0
    %v149 = vsel %vm138, %v113, 0
    %151 = vmatpush.msra.mxu0 0.0
    %152 = vmatpush.msra.mxu0 0.0
    %153 = vmatpush.msra.mxu0 0.0
    %154 = vmatpush.msra.mxu0 0.0
    %155 = vmatpush.msra.mxu0 0.0
    %156 = vmatpush.msra.mxu0 0.0
    %157 = vmatpush.msra.mxu0 0.0
    %158 = vmatpush.msra.mxu0 0.0
    %159 = vmatpush.msra.mxu0 0.0
    %160 = vmatpush.msra.mxu0 0.0
    %161 = vmatpush.msra.mxu0 0.0
    %162 = vmatpush.msra.mxu0 0.0
    %163 = vmatpush.msra.mxu0 %v109
    %164 = vmatpush.msra.mxu0 %v108
    %165 = vmatpush.msra.mxu0 %v107
    %166 = vmatpush.msra.mxu0 %v106
    %167 = vmatmul.f32.gmra.mxu0 %v140
    %v168 = vpop.f32.mrf.mxu0
    %v169 = vadd.f32 %v121, %v168
    %170 = vmatmul.f32.gmra.mxu0 %v143
    %v171 = vpop.f32.mrf.mxu0
    %v172 = vadd.f32 %v126, %v171
    %173 = vmatmul.f32.gmra.mxu0 %v146
    %v174 = vpop.f32.mrf.mxu0
    %v175 = vadd.f32 %v131, %v174
    %176 = vmatmul.f32.gmra.mxu0 %v149
    %v177 = vpop.f32.mrf.mxu0
    %v178 = vadd.f32 %v136, %v177
    %179 = vdwg.mxu0
    %v180 = vtanh.pop %v169
    %v181 = vtanh.pop %v172
    %v182 = vtanh.pop %v175
    %v183 = vtanh.pop %v178
    %v184 = vld [vmem:[%s5] sm:$0xff]
    %v185 = vld [vmem:[%s5 + $0x8] sm:$0xff]
    %v186 = vld [vmem:[%s5 + $0x10] sm:$0xff]
    %v187 = vld [vmem:[%s5 + $0x18] sm:$0xff]
    %189 = vset.pattern.permute.xlu0 0
    %190 = vperm.xlu0 %189, %v184
    %v191 = vpop.permute.xlu0 %190
    %194 = vset.pattern.permute.xlu0 0
    %195 = vperm.xlu0 %194, %v185
    %v196 = vpop.permute.xlu0 %195
    %199 = vset.pattern.permute.xlu0 0
    %200 = vperm.xlu0 %199, %v186
    %v201 = vpop.permute.xlu0 %200
    %204 = vset.pattern.permute.xlu0 0
    %205 = vperm.xlu0 %204, %v187
    %v206 = vpop.permute.xlu0 %205
    %v208 = vmul.f32 %v180, %v191
    %v209 = vmul.f32 %v181, %v196
    %v210 = vmul.f32 %v182, %v201
    %v211 = vmul.f32 %v183, %v206
    %v212 = vadd.f32 %v208, %v209
    %v213 = vadd.f32 %v212, %v210
    %v214 = vadd.f32 %v213, %v211
    %v215 = vrot.slane %v214, 4
    %v216 = vadd.f32 %v214, %v215
    %v217 = vrot.slane %v216, 2
    %v218 = vadd.f32 %v216, %v217
    %v219 = vrot.slane %v218, 1
    %v220 = vadd.f32 %v218, %v219
    %v221 = vld [vmem:[#allocation2] sm:$0x1]
    %223 = vset.pattern.permute.xlu0 0
    %224 = vperm.xlu0 %223, %v221
    %v225 = vpop.permute.xlu0 %224
    %v227 = vperm.slane %v225, 0
    %v228 = vadd.f32 %v220, %v227
    %229 = vst [vmem:[#allocation3] sm:$0x1] %v228
    // Predicated region
    $region30: #{tpu_custom_call.1} parent=1 // pred_check
      _
    $region31: #{tpu_custom_call.1} parent=1 // pred_check_branch
      %231 = sbr.rel (0) target = $region33
    $region32: #{tpu_custom_call.1} parent=1 // pred_region
      %233 = vsyncadd [#allocation4], 0
      %s235 = sshll.u32 [#allocation3], 4
      %s236 = int_to_ptr.vmem [resolvable:$true] %s235
      %s237 = sshll.u32 %s7, 4
      %s238 = int_to_ptr.hbm [resolvable:$true] %s237
      %240 = dma.vmem_to_hbm [thread:$0]  %s236, 16, %s238, [#allocation4]
    $region33: #{tpu_custom_call.1} parent=1 // pred_fallthru
      _
    // Predicated region
    $region34: #{tpu_custom_call.1} parent=1 // pred_check
      _
    $region35: #{tpu_custom_call.1} parent=1 // pred_check_branch
      %242 = sbr.rel (0) target = $region37
    $region36: #{tpu_custom_call.1} parent=1 // pred_region
      %244 = dma.done [#allocation4], 16
    $region37: #{tpu_custom_call.1} parent=1 // pred_fallthru
      _
    %245 = vsyncpa [#allocation4], 1

</llo_original>
